<compile_context>
chip_gen: v6e
topology: v6e:2x2x1
jax: 0.10.0
libtpu: 0.0.40
codegen_flags: <defaults>
</compile_context>

<pallas_src>
import functools

import jax
import jax.numpy as jnp
from jax.experimental import pallas as pl
from jax.experimental.pallas import tpu as pltpu


def _round_up(x, m):
    return (x + m - 1) // m * m


# ---------------------------------------------------------------------------
# Fused Pallas kernel: fc1 + bias + ReLU + fc2 + bias + log_softmax
# ---------------------------------------------------------------------------
def _mlp_logsoftmax_kernel(x_ref, w1_ref, b1_ref, w2_ref, b2_ref, o_ref):
    """x_ref:  (block_m, K)  f32   (cast to bf16 in VMEM for the MXU)
       w1_ref: (K, H)        bf16
       b1_ref: (1, H)        f32
       w2_ref: (H, Np)       bf16  (padded cols are zero)
       b2_ref: (1, Np)       f32   (padded cols pre-poisoned to -1e30)
       o_ref:  (block_m, Np) f32"""
    x = x_ref[...].astype(jnp.bfloat16)
    h = jnp.dot(x, w1_ref[...], preferred_element_type=jnp.float32)
    h = jnp.maximum(h + b1_ref[...], 0.0)
    # TODO(synk): nn.Dropout is the identity in eval mode; train-mode masking
    # would use pltpu.prng_seed + pltpu.prng_random_bits here.
    logits = jnp.dot(h.astype(jnp.bfloat16), w2_ref[...],
                     preferred_element_type=jnp.float32)
    logits = logits + b2_ref[...]          # padded columns land at -1e30
    m = jnp.max(logits, axis=1, keepdims=True)
    z = logits - m
    lse = jnp.log(jnp.sum(jnp.exp(z), axis=1, keepdims=True))
    o_ref[...] = z - lse                   # log_softmax(dim=1)


def _choose_block_m(batch):
    if batch <= 16:
        return batch  # full-extent row block (legal even if batch % 8 != 0)
    # Aim for >=2 grid steps so ("parallel",) can use both v7x TensorCores;
    # cap at 512 rows (MXU-friendly, tiny VMEM footprint on v5e/v6e/v7x).
    return min(512, _round_up(pl.cdiv(batch, 2), 8))


# ---------------------------------------------------------------------------
# Wrapper: pad/transpose weights once, return a jitted forward function
# ---------------------------------------------------------------------------
def make_forward(params):
    w1, b1 = params["w1"], params["b1"]          # (H, K), (H,)
    w2, b2 = params["w2"], params["b2"]          # (O, H), (O,)
    dim_hidden, dim_in = w1.shape
    dim_out = w2.shape[0]

    hp = _round_up(dim_hidden, 128)
    np_ = _round_up(dim_out, 128)

    # Pre-transposed weights (bf16, built once, closed over).  K stays at its
    # natural size (full-extent block dim); only H/O are lane-padded.
    w1t = jnp.zeros((dim_in, hp), jnp.bfloat16).at[:, :dim_hidden].set(
        w1.T.astype(jnp.bfloat16))
    b1p = jnp.zeros((1, hp), jnp.float32).at[0, :dim_hidden].set(
        b1.astype(jnp.float32))
    w2t = jnp.zeros((hp, np_), jnp.bfloat16).at[:dim_hidden, :dim_out].set(
        w2.T.astype(jnp.bfloat16))
    # Fold the padded-column mask into the bias: padded w2 cols are zero, so
    # padded logits == bias == -1e30 -> exp() == 0 in the row-wise LSE.
    b2p = jnp.full((1, np_), -1e30, jnp.float32).at[0, :dim_out].set(
        b2.astype(jnp.float32))

    @jax.jit
    def forward(x):
        batch = x.shape[0]
        block_m = _choose_block_m(batch)
        grid = (pl.cdiv(batch, block_m),)

        out = pl.pallas_call(
            _mlp_logsoftmax_kernel,
            out_shape=jax.ShapeDtypeStruct((batch, np_), jnp.float32),
            grid_spec=pltpu.PrefetchScalarGridSpec(
                num_scalar_prefetch=0,
                grid=grid,
                in_specs=[
                    pl.BlockSpec((block_m, dim_in), lambda i: (i, 0)),
                    pl.BlockSpec((dim_in, hp), lambda i: (0, 0)),
                    pl.BlockSpec((1, hp), lambda i: (0, 0)),
                    pl.BlockSpec((hp, np_), lambda i: (0, 0)),
                    pl.BlockSpec((1, np_), lambda i: (0, 0)),
                ],
                out_specs=pl.BlockSpec((block_m, np_), lambda i: (i, 0)),
            ),
            compiler_params=pltpu.CompilerParams(
                dimension_semantics=("parallel",)),
        )(x.astype(jnp.float32), w1t, b1p, w2t, b2p)

        # Only the lane-padded logit columns need slicing; rows are exact.
        return out[:, :dim_out]

    return forward


# ---------------------------------------------------------------------------
# Pure-JAX reference (correctness check only)
# ---------------------------------------------------------------------------
def _reference_forward(x, params):
    h = x @ params["w1"].T + params["b1"]
    # dropout: identity in eval mode
    h = jax.nn.relu(h)
    logits = h @ params["w2"].T + params["b2"]
    return jax.nn.log_softmax(logits, axis=1)


def init_params(key, dim_in, dim_hidden, dim_out):
    k1, k2, k3, k4 = jax.random.split(key, 4)

    def w(k, shape, fan_in):
        return jax.random.normal(k, shape, jnp.float32) / jnp.sqrt(fan_in)

    return {
        "w1": w(k1, (dim_hidden, dim_in), dim_in),
        "b1": w(k2, (dim_hidden,), dim_in),
        "w2": w(k3, (dim_out, dim_hidden), dim_hidden),
        "b2": w(k4, (dim_out,), dim_hidden),
    }


if __name__ == "__main__":
    # Purchase-100-like shapes: 600 features, 256 hidden, 100 classes.
    dim_in, dim_hidden, dim_out = 600, 256, 100
    batch = 4

    key = jax.random.PRNGKey(0)
    k_param, k_x = jax.random.split(key)
    params = init_params(k_param, dim_in, dim_hidden, dim_out)
    x = jax.random.normal(k_x, (batch, dim_in), jnp.float32)

    forward = make_forward(params)
    out = forward(x)
    out = jax.block_until_ready(out)

    with jax.default_matmul_precision("highest"):
        ref = _reference_forward(x, params)
    assert out.shape == (batch, dim_out)
    assert bool(jnp.allclose(out, ref, atol=3e-2, rtol=3e-2)), (
        f"mismatch: max abs err = {float(jnp.max(jnp.abs(out - ref)))}")
    print("KERNEL_OK")
</pallas_src>

<mosaic_0001>
module attributes {stable_mosaic.version = 11 : i64} {
  func.func @_mlp_logsoftmax_kernel(%arg0: i32, %arg1: memref<4x600xf32, #tpu.memory_space<vmem>>, %arg2: memref<600x256xbf16, #tpu.memory_space<vmem>>, %arg3: memref<1x256xf32, #tpu.memory_space<vmem>>, %arg4: memref<256x128xbf16, #tpu.memory_space<vmem>>, %arg5: memref<1x128xf32, #tpu.memory_space<vmem>>, %arg6: memref<4x128xf32, #tpu.memory_space<vmem>>) attributes {dimension_semantics = [#tpu.dimension_semantics<parallel>], iteration_bounds = array<i64: 1>, scalar_prefetch = 0 : i64, scratch_operands = 0 : i64, tpu.core_type = #tpu.core_type<tc>, window_params = [{transform_indices = @transform_0, window_bounds = array<i64: 4, 600>}, {pipeline_mode = #tpu.pipeline_mode<synchronous>, transform_indices = @transform_1, window_bounds = array<i64: 600, 256>}, {pipeline_mode = #tpu.pipeline_mode<synchronous>, transform_indices = @transform_2, window_bounds = array<i64: 1, 256>}, {pipeline_mode = #tpu.pipeline_mode<synchronous>, transform_indices = @transform_3, window_bounds = array<i64: 256, 128>}, {pipeline_mode = #tpu.pipeline_mode<synchronous>, transform_indices = @transform_4, window_bounds = array<i64: 1, 128>}, {transform_indices = @transform_5, window_bounds = array<i64: 4, 128>}]} {
    %c0 = arith.constant 0 : index
    %c0_0 = arith.constant 0 : index
    %0 = vector.load %arg1[%c0, %c0_0] : memref<4x600xf32, #tpu.memory_space<vmem>>, vector<4x600xf32>
    %1 = arith.truncf %0 : vector<4x600xf32> to vector<4x600xbf16>
    %c0_1 = arith.constant 0 : index
    %c0_2 = arith.constant 0 : index
    %2 = vector.load %arg2[%c0_1, %c0_2] : memref<600x256xbf16, #tpu.memory_space<vmem>>, vector<600x256xbf16>
    %cst = arith.constant dense<0.000000e+00> : vector<4x256xf32>
    %3 = tpu.matmul %1, %2, %cst {dimension_numbers = #tpu.dot_dimension_numbers<[1], [0], [0], [1], [0, 0, 1, 1], [], []>} : vector<4x600xbf16>, vector<600x256xbf16>, vector<4x256xf32> -> vector<4x256xf32>
    %c0_3 = arith.constant 0 : index
    %c0_4 = arith.constant 0 : index
    %4 = vector.load %arg3[%c0_3, %c0_4] : memref<1x256xf32, #tpu.memory_space<vmem>>, vector<1x256xf32>
    %5 = vector.broadcast %4 : vector<1x256xf32> to vector<4x256xf32>
    %6 = arith.addf %3, %5 : vector<4x256xf32>
    %cst_5 = arith.constant 0.000000e+00 : f32
    %7 = vector.broadcast %cst_5 : f32 to vector<4x256xf32>
    %8 = arith.maximumf %6, %7 : vector<4x256xf32>
    %9 = arith.truncf %8 : vector<4x256xf32> to vector<4x256xbf16>
    %c0_6 = arith.constant 0 : index
    %c0_7 = arith.constant 0 : index
    %10 = vector.load %arg4[%c0_6, %c0_7] : memref<256x128xbf16, #tpu.memory_space<vmem>>, vector<256x128xbf16>
    %cst_8 = arith.constant dense<0.000000e+00> : vector<4x128xf32>
    %11 = tpu.matmul %9, %10, %cst_8 {dimension_numbers = #tpu.dot_dimension_numbers<[1], [0], [0], [1], [0, 0, 1, 1], [], []>} : vector<4x256xbf16>, vector<256x128xbf16>, vector<4x128xf32> -> vector<4x128xf32>
    %c0_9 = arith.constant 0 : index
    %c0_10 = arith.constant 0 : index
    %12 = vector.load %arg5[%c0_9, %c0_10] : memref<1x128xf32, #tpu.memory_space<vmem>>, vector<1x128xf32>
    %13 = vector.broadcast %12 : vector<1x128xf32> to vector<4x128xf32>
    %14 = arith.addf %11, %13 : vector<4x128xf32>
    %cst_11 = arith.constant dense<0xFF800000> : vector<4xf32>
    %15 = vector.multi_reduction <maximumf>, %14, %cst_11 [1] : vector<4x128xf32> to vector<4xf32>
    %16 = vector.shape_cast %15 : vector<4xf32> to vector<4x1xf32>
    %17 = vector.broadcast %16 : vector<4x1xf32> to vector<4x128xf32>
    %18 = arith.subf %14, %17 : vector<4x128xf32>
    %19 = math.exp %18 : vector<4x128xf32>
    %cst_12 = arith.constant dense<0.000000e+00> : vector<4xf32>
    %20 = vector.multi_reduction <add>, %19, %cst_12 [1] : vector<4x128xf32> to vector<4xf32>
    %21 = vector.shape_cast %20 : vector<4xf32> to vector<4x1xf32>
    %22 = math.log %21 : vector<4x1xf32>
    %23 = vector.broadcast %22 : vector<4x1xf32> to vector<4x128xf32>
    %24 = arith.subf %18, %23 : vector<4x128xf32>
    %c0_13 = arith.constant 0 : index
    %c0_14 = arith.constant 0 : index
    %25 = vector.load %arg6[%c0_13, %c0_14] : memref<4x128xf32, #tpu.memory_space<vmem>>, vector<4x128xf32>
    tpu.vector_store %arg6[%c0_13, %c0_14], %24 {strides = array<i32>} : memref<4x128xf32, #tpu.memory_space<vmem>>, vector<4x128xf32>,
    return
  }
  func.func @transform_0(%arg0: i32) -> (i32, i32) {
    %c0_i32 = arith.constant 0 : i32
    %c0_i32_0 = arith.constant 0 : i32
    return %arg0, %c0_i32 : i32, i32
  }
  func.func @transform_1(%arg0: i32) -> (i32, i32) {
    %c0_i32 = arith.constant 0 : i32
    %c0_i32_0 = arith.constant 0 : i32
    %c0_i32_1 = arith.constant 0 : i32
    return %c0_i32, %c0_i32_0 : i32, i32
  }
  func.func @transform_2(%arg0: i32) -> (i32, i32) {
    %c0_i32 = arith.constant 0 : i32
    %c0_i32_0 = arith.constant 0 : i32
    %c0_i32_1 = arith.constant 0 : i32
    return %c0_i32, %c0_i32_0 : i32, i32
  }
  func.func @transform_3(%arg0: i32) -> (i32, i32) {
    %c0_i32 = arith.constant 0 : i32
    %c0_i32_0 = arith.constant 0 : i32
    %c0_i32_1 = arith.constant 0 : i32
    return %c0_i32, %c0_i32_0 : i32, i32
  }
  func.func @transform_4(%arg0: i32) -> (i32, i32) {
    %c0_i32 = arith.constant 0 : i32
    %c0_i32_0 = arith.constant 0 : i32
    %c0_i32_1 = arith.constant 0 : i32
    return %c0_i32, %c0_i32_0 : i32, i32
  }
  func.func @transform_5(%arg0: i32) -> (i32, i32) {
    %c0_i32 = arith.constant 0 : i32
    %c0_i32_0 = arith.constant 0 : i32
    return %arg0, %c0_i32 : i32, i32
  }
}

</mosaic_0001>

<llo_original>
// kernel: forward.1
$region0: #{forward.1}
  #allocation0 [shape = 'u32[]', space=smem, size = 0x4, offset = 0x4, fixed_abs, tag = 'smem constant byte address 0x4 - core index']
  #allocation1 [shape = 'u32[144,128]{1,0:T(1,128)}', space=vmem, size = 0x12000, scoped, tag = 'internal scratch']
  %s0 = inlined_call_operand.hbm [shape: f32[4,600], index: 0, kind: input, shape index: {}]
  %s1 = inlined_call_operand.hbm [shape: bf16[600,256], index: 1, kind: input, shape index: {}]
  %s2 = inlined_call_operand.vmem [shape: f32[1,256], index: 2, kind: input, shape index: {}]
  %s3 = inlined_call_operand.hbm [shape: bf16[256,128], index: 3, kind: input, shape index: {}]
  %s4 = inlined_call_operand.vmem [shape: f32[1,128], index: 4, kind: input, shape index: {}]
  %s5 = inlined_call_operand.hbm [shape: f32[4,128], index: 5, kind: output, shape index: {}]
  %s6 = sld [smem:[#allocation0]]
  $region42: #{forward.1} parent=0
    _
  %s8 = ssub.s32 1, %s6
  %s9 = scalar_select 0, %s8, %s6
  $region1: #{forward.1} parent=0
    #allocation2 [shape = 'u8[10240]{0}', space=vmem, size = 0x2800, scoped, tag = 'input window, operand 0, single buffered']
    #allocation3 [shape = 's32[1]{0}', space=sflag, size = 0x4, scoped, tag = 'scoped memory for forward.1']
    #allocation4 [shape = 's32[1]{0}', space=sflag, size = 0x4, scoped, tag = 'scoped memory for forward.1']
    #allocation5 [shape = 'u8[307200]{0}', space=vmem, size = 0x4b000, scoped, tag = 'input window, operand 1, single buffered']
    #allocation6 [shape = 's32[1]{0}', space=sflag, size = 0x4, scoped, tag = 'scoped memory for forward.1']
    #allocation7 [shape = 'u8[65536]{0}', space=vmem, size = 0x10000, scoped, tag = 'input window, operand 3, single buffered']
    #allocation8 [shape = 'u8[2048]{0}', space=vmem, size = 0x800, scoped, tag = 'output window, operand 0, single buffered']
    %10 = vsyncpa [#allocation3], 0
    %11 = vsyncpa [#allocation6], 0
    %12 = vsyncpa [#allocation4], 0
    // Predicated region
    $region2: #{forward.1} parent=1 // pred_check
      _
    $region3: #{forward.1} parent=1 // pred_check_branch
      %14 = sbr.rel (0) target = $region5
    $region4: #{forward.1} parent=1 // pred_region
      %s16 = ssub.s32 320, 320
      %17 = vsyncadd [#allocation3], %s16
      %s19 = sshll.u32 [#allocation2], 4
      %s20 = int_to_ptr.vmem [resolvable:$true] %s19
      %22 = dma.hbm_to_vmem [thread:$0]  %s0, 320, %s20, [#allocation3]
    $region5: #{forward.1} parent=1 // pred_fallthru
      _
    // Predicated region
    $region6: #{forward.1} parent=1 // pred_check
      _
    $region7: #{forward.1} parent=1 // pred_check_branch
      %24 = sbr.rel (0) target = $region9
    $region8: #{forward.1} parent=1 // pred_region
      %s26 = ssub.s32 9600, 9600
      %27 = vsyncadd [#allocation6], %s26
      %s28 = sshll.u32 [#allocation5], 4
      %s29 = int_to_ptr.vmem [resolvable:$true] %s28
      %34 = dma.hbm_to_vmem [thread:$0]  %s1, 9600, %s29, [#allocation6], 128, 128, 8
    $region9: #{forward.1} parent=1 // pred_fallthru
      _
    // Predicated region
    $region10: #{forward.1} parent=1 // pred_check
      _
    $region11: #{forward.1} parent=1 // pred_check_branch
      %36 = sbr.rel (0) target = $region13
    $region12: #{forward.1} parent=1 // pred_region
      _
    $region13: #{forward.1} parent=1 // pred_fallthru
      _
    // Predicated region
    $region14: #{forward.1} parent=1 // pred_check
      _
    $region15: #{forward.1} parent=1 // pred_check_branch
      %38 = sbr.rel (0) target = $region17
    $region16: #{forward.1} parent=1 // pred_region
      %s40 = ssub.s32 2048, 2048
      %41 = vsyncadd [#allocation6], %s40
      %s42 = sshll.u32 [#allocation7], 4
      %s43 = int_to_ptr.vmem [resolvable:$true] %s42
      %48 = dma.hbm_to_vmem [thread:$0]  %s3, 2048, %s43, [#allocation6], 64, 64, 4
    $region17: #{forward.1} parent=1 // pred_fallthru
      _
    // Predicated region
    $region18: #{forward.1} parent=1 // pred_check
      _
    $region19: #{forward.1} parent=1 // pred_check_branch
      %50 = sbr.rel (0) target = $region21
    $region20: #{forward.1} parent=1 // pred_region
      _
    $region21: #{forward.1} parent=1 // pred_fallthru
      _
    // Predicated region
    $region22: #{forward.1} parent=1 // pred_check
      _
    $region23: #{forward.1} parent=1 // pred_check_branch
      %52 = sbr.rel (0) target = $region25
    $region24: #{forward.1} parent=1 // pred_region
      %53 = dma.done [#allocation3], 320
    $region25: #{forward.1} parent=1 // pred_fallthru
      _
    // Predicated region
    $region26: #{forward.1} parent=1 // pred_check
      _
    $region27: #{forward.1} parent=1 // pred_check_branch
      %55 = sbr.rel (0) target = $region29
    $region28: #{forward.1} parent=1 // pred_region
      %56 = dma.done [#allocation6], 9600
    $region29: #{forward.1} parent=1 // pred_fallthru
      _
    // Predicated region
    $region30: #{forward.1} parent=1 // pred_check
      _
    $region31: #{forward.1} parent=1 // pred_check_branch
      %58 = sbr.rel (0) target = $region33
    $region32: #{forward.1} parent=1 // pred_region
      %59 = dma.done [#allocation6], 2048
    $region33: #{forward.1} parent=1 // pred_fallthru
      _
    %v61 = vld [vmem:[#allocation2] sm:$0xff]
    %v62 = vld [vmem:[#allocation2 + $0x8] sm:$0xff]
    %v63 = vld [vmem:[#allocation2 + $0x10] sm:$0xf]
    %v66 = vcombine.high %v61, %v61
    %v67 = vcombine.high %v62, %v62
    %v70 = vpack.c.bf16 %v61, %v61
    %v71 = vpack.c.bf16 %v66, %v66
    %v72 = vpack.c.bf16 %v62, %v62
    %v73 = vpack.c.bf16 %v67, %v67
    %v74 = vpack.c.bf16 %v63, %v63
    %v75 = vld [vmem:[#allocation5] sm:$0xff]
    %v76 = vld [vmem:[#allocation5 + $0x8] sm:$0xff]
    %v77 = vld [vmem:[#allocation5 + $0x10] sm:$0xff]
    %v78 = vld [vmem:[#allocation5 + $0x18] sm:$0xff]
    %v79 = vld [vmem:[#allocation5 + $0x20] sm:$0xff]
    %v80 = vld [vmem:[#allocation5 + $0x28] sm:$0xff]
    %v81 = vld [vmem:[#allocation5 + $0x30] sm:$0xff]
    %v82 = vld [vmem:[#allocation5 + $0x38] sm:$0xff]
    %v83 = vld [vmem:[#allocation5 + $0x40] sm:$0xff]
    %v84 = vld [vmem:[#allocation5 + $0x48] sm:$0xff]
    %v85 = vld [vmem:[#allocation5 + $0x50] sm:$0xff]
    %v86 = vld [vmem:[#allocation5 + $0x58] sm:$0xff]
    %v87 = vld [vmem:[#allocation5 + $0x60] sm:$0xff]
    %v88 = vld [vmem:[#allocation5 + $0x68] sm:$0xff]
    %v89 = vld [vmem:[#allocation5 + $0x70] sm:$0xff]
    %v90 = vld [vmem:[#allocation5 + $0x78] sm:$0xff]
    %v91 = vld [vmem:[#allocation5 + $0x80] sm:$0xff]
    %v92 = vld [vmem:[#allocation5 + $0x88] sm:$0xff]
    %v93 = vld [vmem:[#allocation5 + $0x90] sm:$0xff]
    %v94 = vld [vmem:[#allocation5 + $0x98] sm:$0xff]
    %v95 = vld [vmem:[#allocation5 + $0xa0] sm:$0xff]
    %v96 = vld [vmem:[#allocation5 + $0xa8] sm:$0xff]
    %v97 = vld [vmem:[#allocation5 + $0xb0] sm:$0xff]
    %v98 = vld [vmem:[#allocation5 + $0xb8] sm:$0xff]
    %v99 = vld [vmem:[#allocation5 + $0xc0] sm:$0xff]
    %v100 = vld [vmem:[#allocation5 + $0xc8] sm:$0xff]
    %v101 = vld [vmem:[#allocation5 + $0xd0] sm:$0xff]
    %v102 = vld [vmem:[#allocation5 + $0xd8] sm:$0xff]
    %v103 = vld [vmem:[#allocation5 + $0xe0] sm:$0xff]
    %v104 = vld [vmem:[#allocation5 + $0xe8] sm:$0xff]
    %v105 = vld [vmem:[#allocation5 + $0xf0] sm:$0xff]
    %v106 = vld [vmem:[#allocation5 + $0xf8] sm:$0xff]
    %v107 = vld [vmem:[#allocation5 + $0x100] sm:$0xff]
    %v108 = vld [vmem:[#allocation5 + $0x108] sm:$0xff]
    %v109 = vld [vmem:[#allocation5 + $0x110] sm:$0xff]
    %v110 = vld [vmem:[#allocation5 + $0x118] sm:$0xff]
    %v111 = vld [vmem:[#allocation5 + $0x120] sm:$0xff]
    %v112 = vld [vmem:[#allocation5 + $0x128] sm:$0xff]
    %v113 = vld [vmem:[#allocation5 + $0x130] sm:$0xff]
    %v114 = vld [vmem:[#allocation5 + $0x138] sm:$0xff]
    %v115 = vld [vmem:[#allocation5 + $0x140] sm:$0xff]
    %v116 = vld [vmem:[#allocation5 + $0x148] sm:$0xff]
    %v117 = vld [vmem:[#allocation5 + $0x150] sm:$0xff]
    %v118 = vld [vmem:[#allocation5 + $0x158] sm:$0xff]
    %v119 = vld [vmem:[#allocation5 + $0x160] sm:$0xff]
    %v120 = vld [vmem:[#allocation5 + $0x168] sm:$0xff]
    %v121 = vld [vmem:[#allocation5 + $0x170] sm:$0xff]
    %v122 = vld [vmem:[#allocation5 + $0x178] sm:$0xff]
    %v123 = vld [vmem:[#allocation5 + $0x180] sm:$0xff]
    %v124 = vld [vmem:[#allocation5 + $0x188] sm:$0xff]
    %v125 = vld [vmem:[#allocation5 + $0x190] sm:$0xff]
    %v126 = vld [vmem:[#allocation5 + $0x198] sm:$0xff]
    %v127 = vld [vmem:[#allocation5 + $0x1a0] sm:$0xff]
    %v128 = vld [vmem:[#allocation5 + $0x1a8] sm:$0xff]
    %v129 = vld [vmem:[#allocation5 + $0x1b0] sm:$0xff]
    %v130 = vld [vmem:[#allocation5 + $0x1b8] sm:$0xff]
    %v131 = vld [vmem:[#allocation5 + $0x1c0] sm:$0xff]
    %v132 = vld [vmem:[#allocation5 + $0x1c8] sm:$0xff]
    %v133 = vld [vmem:[#allocation5 + $0x1d0] sm:$0xff]
    %v134 = vld [vmem:[#allocation5 + $0x1d8] sm:$0xff]
    %v135 = vld [vmem:[#allocation5 + $0x1e0] sm:$0xff]
    %v136 = vld [vmem:[#allocation5 + $0x1e8] sm:$0xff]
    %v137 = vld [vmem:[#allocation5 + $0x1f0] sm:$0xff]
    %v138 = vld [vmem:[#allocation5 + $0x1f8] sm:$0xff]
    %v139 = vld [vmem:[#allocation5 + $0x200] sm:$0xff]
    %v140 = vld [vmem:[#allocation5 + $0x208] sm:$0xff]
    %v141 = vld [vmem:[#allocation5 + $0x210] sm:$0xff]
    %v142 = vld [vmem:[#allocation5 + $0x218] sm:$0xff]
    %v143 = vld [vmem:[#allocation5 + $0x220] sm:$0xff]
    %v144 = vld [vmem:[#allocation5 + $0x228] sm:$0xff]
    %v145 = vld [vmem:[#allocation5 + $0x230] sm:$0xff]
    %v146 = vld [vmem:[#allocation5 + $0x238] sm:$0xff]
    %v147 = vld [vmem:[#allocation5 + $0x240] sm:$0xff]
    %v148 = vld [vmem:[#allocation5 + $0x248] sm:$0xff]
    %v149 = vld [vmem:[#allocation5 + $0x250] sm:$0xff]
    %v150 = vld [vmem:[%s2] sm:$0x3]
    %v152 = vlaneseq
    %v153 = vshrl.u32 %v152, 7
    %v154 = vsub.s32 0, %v153
    %v155 = vrot.slane %v150, %v154
    %v156 = vlaneseq
    %v157 = vshrl.u32 %v156, 7
    %v158 = vsub.s32 1, %v157
    %v159 = vrot.slane %v150, %v158
    %v237 = vunpack.c.l.b16 %v75
    %v238 = vunpack.c.h.b16 %v75
    %v239 = vunpack.c.l.b16 %v76
    %v240 = vunpack.c.h.b16 %v76
    %v241 = vunpack.c.l.b16 %v77
    %v242 = vunpack.c.h.b16 %v77
    %v243 = vunpack.c.l.b16 %v78
    %v244 = vunpack.c.h.b16 %v78
    %v245 = vunpack.c.l.b16 %v79
    %v246 = vunpack.c.h.b16 %v79
    %v247 = vunpack.c.l.b16 %v80
    %v248 = vunpack.c.h.b16 %v80
    %v249 = vunpack.c.l.b16 %v81
    %v250 = vunpack.c.h.b16 %v81
    %v251 = vunpack.c.l.b16 %v82
    %v252 = vunpack.c.h.b16 %v82
    %v253 = vunpack.c.l.b16 %v83
    %v254 = vunpack.c.h.b16 %v83
    %v255 = vunpack.c.l.b16 %v84
    %v256 = vunpack.c.h.b16 %v84
    %v257 = vunpack.c.l.b16 %v85
    %v258 = vunpack.c.h.b16 %v85
    %v259 = vunpack.c.l.b16 %v86
    %v260 = vunpack.c.h.b16 %v86
    %v261 = vunpack.c.l.b16 %v87
    %v262 = vunpack.c.h.b16 %v87
    %v263 = vunpack.c.l.b16 %v88
    %v264 = vunpack.c.h.b16 %v88
    %v265 = vunpack.c.l.b16 %v89
    %v266 = vunpack.c.h.b16 %v89
    %v267 = vunpack.c.l.b16 %v90
    %v268 = vunpack.c.h.b16 %v90
    %v269 = vunpack.c.l.b16 %v91
    %v270 = vunpack.c.h.b16 %v91
    %v271 = vunpack.c.l.b16 %v92
    %v272 = vunpack.c.h.b16 %v92
    %v273 = vunpack.c.l.b16 %v93
    %v274 = vunpack.c.h.b16 %v93
    %v275 = vunpack.c.l.b16 %v94
    %v276 = vunpack.c.h.b16 %v94
    %v277 = vunpack.c.l.b16 %v95
    %v278 = vunpack.c.h.b16 %v95
    %v279 = vunpack.c.l.b16 %v96
    %v280 = vunpack.c.h.b16 %v96
    %v281 = vunpack.c.l.b16 %v97
    %v282 = vunpack.c.h.b16 %v97
    %v283 = vunpack.c.l.b16 %v98
    %v284 = vunpack.c.h.b16 %v98
    %v285 = vunpack.c.l.b16 %v99
    %v286 = vunpack.c.h.b16 %v99
    %v287 = vunpack.c.l.b16 %v100
    %v288 = vunpack.c.h.b16 %v100
    %v289 = vunpack.c.l.b16 %v101
    %v290 = vunpack.c.h.b16 %v101
    %v291 = vunpack.c.l.b16 %v102
    %v292 = vunpack.c.h.b16 %v102
    %v293 = vunpack.c.l.b16 %v103
    %v294 = vunpack.c.h.b16 %v103
    %v295 = vunpack.c.l.b16 %v104
    %v296 = vunpack.c.h.b16 %v104
    %v297 = vunpack.c.l.b16 %v105
    %v298 = vunpack.c.h.b16 %v105
    %v299 = vunpack.c.l.b16 %v106
    %v300 = vunpack.c.h.b16 %v106
    %v301 = vunpack.c.l.b16 %v107
    %v302 = vunpack.c.h.b16 %v107
    %v303 = vunpack.c.l.b16 %v108
    %v304 = vunpack.c.h.b16 %v108
    %v305 = vunpack.c.l.b16 %v109
    %v306 = vunpack.c.h.b16 %v109
    %v307 = vunpack.c.l.b16 %v110
    %v308 = vunpack.c.h.b16 %v110
    %v309 = vunpack.c.l.b16 %v111
    %v310 = vunpack.c.h.b16 %v111
    %v311 = vunpack.c.l.b16 %v112
    %v312 = vunpack.c.h.b16 %v112
    %v313 = vunpack.c.l.b16 %v113
    %v314 = vunpack.c.h.b16 %v113
    %v315 = vunpack.c.l.b16 %v114
    %v316 = vunpack.c.h.b16 %v114
    %v317 = vunpack.c.l.b16 %v115
    %v318 = vunpack.c.h.b16 %v115
    %v319 = vunpack.c.l.b16 %v116
    %v320 = vunpack.c.h.b16 %v116
    %v321 = vunpack.c.l.b16 %v117
    %v322 = vunpack.c.h.b16 %v117
    %v323 = vunpack.c.l.b16 %v118
    %v324 = vunpack.c.h.b16 %v118
    %v325 = vunpack.c.l.b16 %v119
    %v326 = vunpack.c.h.b16 %v119
    %v327 = vunpack.c.l.b16 %v120
    %v328 = vunpack.c.h.b16 %v120
    %v329 = vunpack.c.l.b16 %v121
    %v330 = vunpack.c.h.b16 %v121
    %v331 = vunpack.c.l.b16 %v122
    %v332 = vunpack.c.h.b16 %v122
    %v333 = vunpack.c.l.b16 %v123
    %v334 = vunpack.c.h.b16 %v123
    %v335 = vunpack.c.l.b16 %v124
    %v336 = vunpack.c.h.b16 %v124
    %v337 = vunpack.c.l.b16 %v125
    %v338 = vunpack.c.h.b16 %v125
    %v339 = vunpack.c.l.b16 %v126
    %v340 = vunpack.c.h.b16 %v126
    %v341 = vunpack.c.l.b16 %v127
    %v342 = vunpack.c.h.b16 %v127
    %v343 = vunpack.c.l.b16 %v128
    %v344 = vunpack.c.h.b16 %v128
    %v345 = vunpack.c.l.b16 %v129
    %v346 = vunpack.c.h.b16 %v129
    %v347 = vunpack.c.l.b16 %v130
    %v348 = vunpack.c.h.b16 %v130
    %v349 = vunpack.c.l.b16 %v131
    %v350 = vunpack.c.h.b16 %v131
    %v351 = vunpack.c.l.b16 %v132
    %v352 = vunpack.c.h.b16 %v132
    %v353 = vunpack.c.l.b16 %v133
    %v354 = vunpack.c.h.b16 %v133
    %v355 = vunpack.c.l.b16 %v134
    %v356 = vunpack.c.h.b16 %v134
    %v357 = vunpack.c.l.b16 %v135
    %v358 = vunpack.c.h.b16 %v135
    %v359 = vunpack.c.l.b16 %v136
    %v360 = vunpack.c.h.b16 %v136
    %v361 = vunpack.c.l.b16 %v137
    %v362 = vunpack.c.h.b16 %v137
    %v363 = vunpack.c.l.b16 %v138
    %v364 = vunpack.c.h.b16 %v138
    %v365 = vunpack.c.l.b16 %v139
    %v366 = vunpack.c.h.b16 %v139
    %v367 = vunpack.c.l.b16 %v140
    %v368 = vunpack.c.h.b16 %v140
    %v369 = vunpack.c.l.b16 %v141
    %v370 = vunpack.c.h.b16 %v141
    %v371 = vunpack.c.l.b16 %v142
    %v372 = vunpack.c.h.b16 %v142
    %v373 = vunpack.c.l.b16 %v143
    %v374 = vunpack.c.h.b16 %v143
    %v375 = vunpack.c.l.b16 %v144
    %v376 = vunpack.c.h.b16 %v144
    %v377 = vunpack.c.l.b16 %v145
    %v378 = vunpack.c.h.b16 %v145
    %v379 = vunpack.c.l.b16 %v146
    %v380 = vunpack.c.h.b16 %v146
    %v381 = vunpack.c.l.b16 %v147
    %v382 = vunpack.c.h.b16 %v147
    %v383 = vunpack.c.l.b16 %v148
    %v384 = vunpack.c.h.b16 %v148
    %v385 = vunpack.c.l.b16 %v149
    %v386 = vunpack.c.h.b16 %v149
    %v387 = vpack.c.b16 %v239, %v237
    %v388 = vpack.c.b16 %v240, %v238
    %v389 = vpack.c.b16 %v243, %v241
    %v390 = vpack.c.b16 %v244, %v242
    %v391 = vpack.c.b16 %v247, %v245
    %v392 = vpack.c.b16 %v248, %v246
    %v393 = vpack.c.b16 %v251, %v249
    %v394 = vpack.c.b16 %v252, %v250
    %v395 = vpack.c.b16 %v255, %v253
    %v396 = vpack.c.b16 %v256, %v254
    %v397 = vpack.c.b16 %v259, %v257
    %v398 = vpack.c.b16 %v260, %v258
    %v399 = vpack.c.b16 %v263, %v261
    %v400 = vpack.c.b16 %v264, %v262
    %v401 = vpack.c.b16 %v267, %v265
    %v402 = vpack.c.b16 %v268, %v266
    %v403 = vpack.c.b16 %v271, %v269
    %v404 = vpack.c.b16 %v272, %v270
    %v405 = vpack.c.b16 %v275, %v273
    %v406 = vpack.c.b16 %v276, %v274
    %v407 = vpack.c.b16 %v279, %v277
    %v408 = vpack.c.b16 %v280, %v278
    %v409 = vpack.c.b16 %v283, %v281
    %v410 = vpack.c.b16 %v284, %v282
    %v411 = vpack.c.b16 %v287, %v285
    %v412 = vpack.c.b16 %v288, %v286
    %v413 = vpack.c.b16 %v291, %v289
    %v414 = vpack.c.b16 %v292, %v290
    %v415 = vpack.c.b16 %v295, %v293
    %v416 = vpack.c.b16 %v296, %v294
    %v417 = vpack.c.b16 %v299, %v297
    %v418 = vpack.c.b16 %v300, %v298
    %v419 = vpack.c.b16 %v303, %v301
    %v420 = vpack.c.b16 %v304, %v302
    %v421 = vpack.c.b16 %v307, %v305
    %v422 = vpack.c.b16 %v308, %v306
    %v423 = vpack.c.b16 %v311, %v309
    %v424 = vpack.c.b16 %v312, %v310
    %v425 = vpack.c.b16 %v315, %v313
    %v426 = vpack.c.b16 %v316, %v314
    %v427 = vpack.c.b16 %v319, %v317
    %v428 = vpack.c.b16 %v320, %v318
    %v429 = vpack.c.b16 %v323, %v321
    %v430 = vpack.c.b16 %v324, %v322
    %v431 = vpack.c.b16 %v327, %v325
    %v432 = vpack.c.b16 %v328, %v326
    %v433 = vpack.c.b16 %v331, %v329
    %v434 = vpack.c.b16 %v332, %v330
    %v435 = vpack.c.b16 %v335, %v333
    %v436 = vpack.c.b16 %v336, %v334
    %v437 = vpack.c.b16 %v339, %v337
    %v438 = vpack.c.b16 %v340, %v338
    %v439 = vpack.c.b16 %v343, %v341
    %v440 = vpack.c.b16 %v344, %v342
    %v441 = vpack.c.b16 %v347, %v345
    %v442 = vpack.c.b16 %v348, %v346
    %v443 = vpack.c.b16 %v351, %v349
    %v444 = vpack.c.b16 %v352, %v350
    %v445 = vpack.c.b16 %v355, %v353
    %v446 = vpack.c.b16 %v356, %v354
    %v447 = vpack.c.b16 %v359, %v357
    %v448 = vpack.c.b16 %v360, %v358
    %v449 = vpack.c.b16 %v363, %v361
    %v450 = vpack.c.b16 %v364, %v362
    %v451 = vpack.c.b16 %v367, %v365
    %v452 = vpack.c.b16 %v368, %v366
    %v453 = vpack.c.b16 %v371, %v369
    %v454 = vpack.c.b16 %v372, %v370
    %v455 = vpack.c.b16 %v375, %v373
    %v456 = vpack.c.b16 %v376, %v374
    %v457 = vpack.c.b16 %v379, %v377
    %v458 = vpack.c.b16 %v380, %v378
    %v459 = vpack.c.b16 %v383, %v381
    %v460 = vpack.c.b16 %v384, %v382
    %v461 = vpack.c.b16 %v385, %v385
    %v462 = vpack.c.b16 %v386, %v386
    %vm537 = vcmask 719872
    %v539 = vsel %vm537, %v74, 0
    %vm541 = vcmask 1043456
    %v543 = vsel %vm541, %v461, 0
    %v546 = vsel %vm541, %v462, 0
    %548 = vmatprep.subr.bf16.mxu0 %v402
    %549 = vmatpush1.bf16.msra.mxu0 %v401
    %550 = vmatprep.subr.bf16.mxu0 %v400
    %551 = vmatpush1.bf16.msra.mxu0 %v399
    %552 = vmatprep.subr.bf16.mxu0 %v398
    %553 = vmatpush1.bf16.msra.mxu0 %v397
    %554 = vmatprep.subr.bf16.mxu0 %v396
    %555 = vmatpush1.bf16.msra.mxu0 %v395
    %556 = vmatprep.subr.bf16.mxu0 %v394
    %557 = vmatpush1.bf16.msra.mxu0 %v393
    %558 = vmatprep.subr.bf16.mxu0 %v392
    %559 = vmatpush1.bf16.msra.mxu0 %v391
    %560 = vmatprep.subr.bf16.mxu0 %v390
    %561 = vmatpush1.bf16.msra.mxu0 %v389
    %562 = vmatprep.subr.bf16.mxu0 %v388
    %563 = vmatpush1.bf16.msra.mxu0 %v387
    %564 = vmatprep.subr.bf16.mxu0 %v418
    %565 = vmatpush2.bf16.msra.mxu0 %v417
    %566 = vmatprep.subr.bf16.mxu0 %v416
    %567 = vmatpush2.bf16.msra.mxu0 %v415
    %568 = vmatprep.subr.bf16.mxu0 %v414
    %569 = vmatpush2.bf16.msra.mxu0 %v413
    %570 = vmatprep.subr.bf16.mxu0 %v412
    %571 = vmatpush2.bf16.msra.mxu0 %v411
    %572 = vmatprep.subr.bf16.mxu0 %v410
    %573 = vmatpush2.bf16.msra.mxu0 %v409
    %574 = vmatprep.subr.bf16.mxu0 %v408
    %575 = vmatpush2.bf16.msra.mxu0 %v407
    %576 = vmatprep.subr.bf16.mxu0 %v406
    %577 = vmatpush2.bf16.msra.mxu0 %v405
    %578 = vmatprep.subr.bf16.mxu0 %v404
    %579 = vmatpush2.bf16.msra.mxu0 %v403
    %580 = vmatprep.mubr.bf16.mxu0 %v71
    %581 = vmatmul.mubr.bf16.gmra.mxu0 %v70
    %v582 = vpop.f32.mrf.mxu0
    %v583 = vadd.f32 %v155, %v582
    %v584 = vpop.f32.mrf.mxu0
    %v585 = vadd.f32 %v159, %v584
    %v586 = vpop.f32.mrf.mxu0
    %v587 = vpop.f32.mrf.mxu0
    %588 = vdwg.mxu0
    %589 = vmatprep.subr.bf16.mxu0 %v434
    %590 = vmatpush1.bf16.msra.mxu0 %v433
    %591 = vmatprep.subr.bf16.mxu0 %v432
    %592 = vmatpush1.bf16.msra.mxu0 %v431
    %593 = vmatprep.subr.bf16.mxu0 %v430
    %594 = vmatpush1.bf16.msra.mxu0 %v429
    %595 = vmatprep.subr.bf16.mxu0 %v428
    %596 = vmatpush1.bf16.msra.mxu0 %v427
    %597 = vmatprep.subr.bf16.mxu0 %v426
    %598 = vmatpush1.bf16.msra.mxu0 %v425
    %599 = vmatprep.subr.bf16.mxu0 %v424
    %600 = vmatpush1.bf16.msra.mxu0 %v423
    %601 = vmatprep.subr.bf16.mxu0 %v422
    %602 = vmatpush1.bf16.msra.mxu0 %v421
    %603 = vmatprep.subr.bf16.mxu0 %v420
    %604 = vmatpush1.bf16.msra.mxu0 %v419
    %605 = vmatprep.subr.bf16.mxu0 %v450
    %606 = vmatpush2.bf16.msra.mxu0 %v449
    %607 = vmatprep.subr.bf16.mxu0 %v448
    %608 = vmatpush2.bf16.msra.mxu0 %v447
    %609 = vmatprep.subr.bf16.mxu0 %v446
    %610 = vmatpush2.bf16.msra.mxu0 %v445
    %611 = vmatprep.subr.bf16.mxu0 %v444
    %612 = vmatpush2.bf16.msra.mxu0 %v443
    %613 = vmatprep.subr.bf16.mxu0 %v442
    %614 = vmatpush2.bf16.msra.mxu0 %v441
    %615 = vmatprep.subr.bf16.mxu0 %v440
    %616 = vmatpush2.bf16.msra.mxu0 %v439
    %617 = vmatprep.subr.bf16.mxu0 %v438
    %618 = vmatpush2.bf16.msra.mxu0 %v437
    %619 = vmatprep.subr.bf16.mxu0 %v436
    %620 = vmatpush2.bf16.msra.mxu0 %v435
    %621 = vmatprep.mubr.bf16.mxu0 %v73
    %622 = vmatmul.mubr.bf16.gmra.mxu0 %v72
    %v623 = vpop.f32.mrf.mxu0
    %v624 = vadd.f32 %v583, %v623
    %v625 = vpop.f32.mrf.mxu0
    %v626 = vadd.f32 %v585, %v625
    %v627 = vpop.f32.mrf.mxu0
    %v628 = vpop.f32.mrf.mxu0
    %629 = vdwg.mxu0
    %630 = vmatprep.subr.bf16.mxu0 0
    %631 = vmatpush1.bf16.msra.mxu0 0
    %632 = vmatprep.subr.bf16.mxu0 0
    %633 = vmatpush1.bf16.msra.mxu0 0
    %634 = vmatprep.subr.bf16.mxu0 %v546
    %635 = vmatpush1.bf16.msra.mxu0 %v543
    %636 = vmatprep.subr.bf16.mxu0 %v460
    %637 = vmatpush1.bf16.msra.mxu0 %v459
    %638 = vmatprep.subr.bf16.mxu0 %v458
    %639 = vmatpush1.bf16.msra.mxu0 %v457
    %640 = vmatprep.subr.bf16.mxu0 %v456
    %641 = vmatpush1.bf16.msra.mxu0 %v455
    %642 = vmatprep.subr.bf16.mxu0 %v454
    %643 = vmatpush1.bf16.msra.mxu0 %v453
    %644 = vmatprep.subr.bf16.mxu0 %v452
    %645 = vmatpush1.bf16.msra.mxu0 %v451
    %646 = vmatprep.subr.bf16.mxu0 0
    %647 = vmatpush2.bf16.msra.mxu0 0
    %648 = vmatprep.subr.bf16.mxu0 0
    %649 = vmatpush2.bf16.msra.mxu0 0
    %650 = vmatprep.subr.bf16.mxu0 0
    %651 = vmatpush2.bf16.msra.mxu0 0
    %652 = vmatprep.subr.bf16.mxu0 0
    %653 = vmatpush2.bf16.msra.mxu0 0
    %654 = vmatprep.subr.bf16.mxu0 0
    %655 = vmatpush2.bf16.msra.mxu0 0
    %656 = vmatprep.subr.bf16.mxu0 0
    %657 = vmatpush2.bf16.msra.mxu0 0
    %658 = vmatprep.subr.bf16.mxu0 0
    %659 = vmatpush2.bf16.msra.mxu0 0
    %660 = vmatprep.subr.bf16.mxu0 0
    %661 = vmatpush2.bf16.msra.mxu0 0
    %662 = vmatprep.mubr.bf16.mxu0 0
    %663 = vmatmul.mubr.bf16.gmra.mxu0 %v539
    %v664 = vpop.f32.mrf.mxu0
    %v665 = vadd.f32 %v624, %v664
    %v666 = vpop.f32.mrf.mxu0
    %v667 = vadd.f32 %v626, %v666
    %v668 = vpop.f32.mrf.mxu0
    %v669 = vpop.f32.mrf.mxu0
    %670 = vdwg.mxu0
    %v671 = vmax.f32 %v665, 0.0
    %v672 = vmax.f32 %v667, 0.0
    %v673 = vpack.c.bf16 %v671, %v671
    %v674 = vpack.c.bf16 %v672, %v672
    %v675 = vld [vmem:[#allocation7] sm:$0xf]
    %v676 = vld [vmem:[#allocation7 + $0x4] sm:$0xf]
    %v677 = vld [vmem:[#allocation7 + $0x8] sm:$0xf]
    %v678 = vld [vmem:[#allocation7 + $0xc] sm:$0xf]
    %v679 = vld [vmem:[#allocation7 + $0x10] sm:$0xf]
    %v680 = vld [vmem:[#allocation7 + $0x14] sm:$0xf]
    %v681 = vld [vmem:[#allocation7 + $0x18] sm:$0xf]
    %v682 = vld [vmem:[#allocation7 + $0x1c] sm:$0xf]
    %v683 = vld [vmem:[#allocation7 + $0x20] sm:$0xf]
    %v684 = vld [vmem:[#allocation7 + $0x24] sm:$0xf]
    %v685 = vld [vmem:[#allocation7 + $0x28] sm:$0xf]
    %v686 = vld [vmem:[#allocation7 + $0x2c] sm:$0xf]
    %v687 = vld [vmem:[#allocation7 + $0x30] sm:$0xf]
    %v688 = vld [vmem:[#allocation7 + $0x34] sm:$0xf]
    %v689 = vld [vmem:[#allocation7 + $0x38] sm:$0xf]
    %v690 = vld [vmem:[#allocation7 + $0x3c] sm:$0xf]
    %v691 = vld [vmem:[#allocation7 + $0x40] sm:$0xf]
    %v692 = vld [vmem:[#allocation7 + $0x44] sm:$0xf]
    %v693 = vld [vmem:[#allocation7 + $0x48] sm:$0xf]
    %v694 = vld [vmem:[#allocation7 + $0x4c] sm:$0xf]
    %v695 = vld [vmem:[#allocation7 + $0x50] sm:$0xf]
    %v696 = vld [vmem:[#allocation7 + $0x54] sm:$0xf]
    %v697 = vld [vmem:[#allocation7 + $0x58] sm:$0xf]
    %v698 = vld [vmem:[#allocation7 + $0x5c] sm:$0xf]
    %v699 = vld [vmem:[#allocation7 + $0x60] sm:$0xf]
    %v700 = vld [vmem:[#allocation7 + $0x64] sm:$0xf]
    %v701 = vld [vmem:[#allocation7 + $0x68] sm:$0xf]
    %v702 = vld [vmem:[#allocation7 + $0x6c] sm:$0xf]
    %v703 = vld [vmem:[#allocation7 + $0x70] sm:$0xf]
    %v704 = vld [vmem:[#allocation7 + $0x74] sm:$0xf]
    %v705 = vld [vmem:[#allocation7 + $0x78] sm:$0xf]
    %v706 = vld [vmem:[#allocation7 + $0x7c] sm:$0xf]
    %v707 = vld [vmem:[%s4] sm:$0x1]
    %v709 = vlaneseq
    %v710 = vshrl.u32 %v709, 7
    %v711 = vsub.s32 0, %v710
    %v712 = vrot.slane %v707, %v711
    %v746 = vunpack.c.l.b16 %v675
    %v747 = vunpack.c.l.b16 %v676
    %v748 = vunpack.c.l.b16 %v677
    %v749 = vunpack.c.l.b16 %v678
    %v750 = vunpack.c.l.b16 %v679
    %v751 = vunpack.c.l.b16 %v680
    %v752 = vunpack.c.l.b16 %v681
    %v753 = vunpack.c.l.b16 %v682
    %v754 = vunpack.c.l.b16 %v683
    %v755 = vunpack.c.l.b16 %v684
    %v756 = vunpack.c.l.b16 %v685
    %v757 = vunpack.c.l.b16 %v686
    %v758 = vunpack.c.l.b16 %v687
    %v759 = vunpack.c.l.b16 %v688
    %v760 = vunpack.c.l.b16 %v689
    %v761 = vunpack.c.l.b16 %v690
    %v762 = vunpack.c.l.b16 %v691
    %v763 = vunpack.c.l.b16 %v692
    %v764 = vunpack.c.l.b16 %v693
    %v765 = vunpack.c.l.b16 %v694
    %v766 = vunpack.c.l.b16 %v695
    %v767 = vunpack.c.l.b16 %v696
    %v768 = vunpack.c.l.b16 %v697
    %v769 = vunpack.c.l.b16 %v698
    %v770 = vunpack.c.l.b16 %v699
    %v771 = vunpack.c.l.b16 %v700
    %v772 = vunpack.c.l.b16 %v701
    %v773 = vunpack.c.l.b16 %v702
    %v774 = vunpack.c.l.b16 %v703
    %v775 = vunpack.c.l.b16 %v704
    %v776 = vunpack.c.l.b16 %v705
    %v777 = vunpack.c.l.b16 %v706
    %v778 = vpack.c.b16 %v747, %v746
    %v779 = vpack.c.b16 %v749, %v748
    %v780 = vpack.c.b16 %v751, %v750
    %v781 = vpack.c.b16 %v753, %v752
    %v782 = vpack.c.b16 %v755, %v754
    %v783 = vpack.c.b16 %v757, %v756
    %v784 = vpack.c.b16 %v759, %v758
    %v785 = vpack.c.b16 %v761, %v760
    %v786 = vpack.c.b16 %v763, %v762
    %v787 = vpack.c.b16 %v765, %v764
    %v788 = vpack.c.b16 %v767, %v766
    %v789 = vpack.c.b16 %v769, %v768
    %v790 = vpack.c.b16 %v771, %v770
    %v791 = vpack.c.b16 %v773, %v772
    %v792 = vpack.c.b16 %v775, %v774
    %v793 = vpack.c.b16 %v777, %v776
    %810 = vmatprep.subr.bf16.mxu0 0
    %811 = vmatpush1.bf16.msra.mxu0 %v785
    %812 = vmatprep.subr.bf16.mxu0 0
    %813 = vmatpush1.bf16.msra.mxu0 %v784
    %814 = vmatprep.subr.bf16.mxu0 0
    %815 = vmatpush1.bf16.msra.mxu0 %v783
    %816 = vmatprep.subr.bf16.mxu0 0
    %817 = vmatpush1.bf16.msra.mxu0 %v782
    %818 = vmatprep.subr.bf16.mxu0 0
    %819 = vmatpush1.bf16.msra.mxu0 %v781
    %820 = vmatprep.subr.bf16.mxu0 0
    %821 = vmatpush1.bf16.msra.mxu0 %v780
    %822 = vmatprep.subr.bf16.mxu0 0
    %823 = vmatpush1.bf16.msra.mxu0 %v779
    %824 = vmatprep.subr.bf16.mxu0 0
    %825 = vmatpush1.bf16.msra.mxu0 %v778
    %826 = vmatprep.subr.bf16.mxu0 0
    %827 = vmatpush2.bf16.msra.mxu0 %v793
    %828 = vmatprep.subr.bf16.mxu0 0
    %829 = vmatpush2.bf16.msra.mxu0 %v792
    %830 = vmatprep.subr.bf16.mxu0 0
    %831 = vmatpush2.bf16.msra.mxu0 %v791
    %832 = vmatprep.subr.bf16.mxu0 0
    %833 = vmatpush2.bf16.msra.mxu0 %v790
    %834 = vmatprep.subr.bf16.mxu0 0
    %835 = vmatpush2.bf16.msra.mxu0 %v789
    %836 = vmatprep.subr.bf16.mxu0 0
    %837 = vmatpush2.bf16.msra.mxu0 %v788
    %838 = vmatprep.subr.bf16.mxu0 0
    %839 = vmatpush2.bf16.msra.mxu0 %v787
    %840 = vmatprep.subr.bf16.mxu0 0
    %841 = vmatpush2.bf16.msra.mxu0 %v786
    %842 = vmatprep.mubr.bf16.mxu0 %v674
    %843 = vmatmul.mubr.bf16.gmra.mxu0 %v673
    %v844 = vpop.f32.mrf.mxu0
    %v845 = vadd.f32 %v712, %v844
    %v846 = vpop.f32.mrf.mxu0
    %v847 = vpop.f32.mrf.mxu0
    %v848 = vpop.f32.mrf.mxu0
    %849 = vdwg.mxu0
    %v850 = vsel %vm541, %v845, -inf
    %851 = vmax.xlane.f32.xlu0 %v850
    %v852 = vpop.xlane.xlu0 %851
    %v853 = vsub.f32 %v845, %v852
    %v854 = vmul.f32 %v853, 1.442695
    %v855 = vpow.pop %v854
    %v856 = vsel %vm541, %v855, 0.0
    %857 = vadd.xlane.f32.xlu0 %v856
    %v858 = vpop.xlane.xlu0 %857
    %v859 = vlog2.pop %v858
    %v860 = vmul.f32 %v859, 0.6931472
    %v861 = vsub.f32 %v853, %v860
    %862 = vst [vmem:[#allocation8] sm:$0xf] %v861
    // Predicated region
    $region34: #{forward.1} parent=1 // pred_check
      _
    $region35: #{forward.1} parent=1 // pred_check_branch
      %864 = sbr.rel (0) target = $region37
    $region36: #{forward.1} parent=1 // pred_region
      %s866 = ssub.s32 64, 64
      %867 = vsyncadd [#allocation4], %s866
      %s869 = sshll.u32 [#allocation8], 4
      %s870 = int_to_ptr.vmem [resolvable:$true] %s869
      %872 = dma.vmem_to_hbm [thread:$0]  %s870, 64, %s5, [#allocation4]
    $region37: #{forward.1} parent=1 // pred_fallthru
      _
    // Predicated region
    $region38: #{forward.1} parent=1 // pred_check
      _
    $region39: #{forward.1} parent=1 // pred_check_branch
      %874 = sbr.rel (0) target = $region41
    $region40: #{forward.1} parent=1 // pred_region
      %875 = dma.done [#allocation4], 64
    $region41: #{forward.1} parent=1 // pred_fallthru
      _
    %876 = vsyncpa [#allocation3], 1
    %877 = vsyncpa [#allocation6], 1
    %878 = vsyncpa [#allocation4], 1

</llo_original>
